<compile_context>
chip_gen: v7x
topology: tpu7x:2x2x1
jax: 0.10.0
libtpu: 0.0.40
codegen_flags: <defaults>
</compile_context>

<pallas_src>
import functools

import jax
import jax.numpy as jnp
from jax import lax
from jax.experimental import pallas as pl
from jax.experimental.pallas import tpu as pltpu


def _round_up(x, m):
    return ((x + m - 1) // m) * m


def _pick_pack(batch, in_dim, out_dim):
    """Lane-packing factor P: fold P rows into one lane-dense row.

    Requires batch % P == 0 so the wrapper reshape (B, D) -> (B/P, P*D) is a
    free contiguous merge (no HBM copy). Prefers the smallest P that makes BOTH
    the feature lanes (P*D) and the hash lanes (P*K) multiples of 128.
    """
    def feat_ok(p):
        return batch % p == 0 and (p * in_dim) % 128 == 0
    for p in (2, 4, 8, 16):
        if feat_ok(p) and (p * out_dim) % 128 == 0:
            return p
    for p in (2, 4, 8, 16):
        if feat_ok(p):
            return p
    return 1


def _lsh_kernel(fs_ref, ft_ref, wt_ref, b_ref, out_ref, *,
                total_rows, block_rows, ragged):
    i = pl.program_id(0)

    fs = fs_ref[...]                          # (block_rows, Dp), native dtype
    ft = ft_ref[...]
    wt = wt_ref[...]                          # (Dp, Kp) resident (block-diag) W^T
    b = b_ref[...].astype(jnp.float32)        # (1, Kp)

    # ---- MSE squared differences (f32 elementwise path) ----
    diff = fs.astype(jnp.float32) - ft.astype(jnp.float32)
    sq = diff * diff                          # (block_rows, Dp)

    # ---- Two projections sharing the resident weight (no concat copy) ----
    hs = jnp.dot(fs, wt, preferred_element_type=jnp.float32) + b   # (block_rows, Kp)
    ht = jnp.dot(ft, wt, preferred_element_type=jnp.float32) + b
    label = (ht > 0.0).astype(jnp.float32)    # exact PyTorch (hash_t > 0).float()
    # Numerically-stable BCEWithLogitsLoss (matches PyTorch).
    bce = jnp.maximum(hs, 0.0) - hs * label + jnp.log1p(jnp.exp(-jnp.abs(hs)))

    if ragged:
        # Tail block past the true row count holds unspecified data: mask the
        # per-ROW sums only (cheap (block_rows, 1) select, not a full-width where).
        row = i * block_rows + lax.broadcasted_iota(jnp.int32, (block_rows, 1), 0)
        valid = row < total_rows
        mse_part = jnp.sum(jnp.where(valid, jnp.sum(sq, axis=1, keepdims=True), 0.0))
        bce_part = jnp.sum(jnp.where(valid, jnp.sum(bce, axis=1, keepdims=True), 0.0))
    else:
        mse_part = jnp.sum(sq)
        bce_part = jnp.sum(bce)

    # Per-tile partial sums -> lane-dense (8, 128) tile: row 0 = MSE, row 1 = BCE.
    rid = lax.broadcasted_iota(jnp.int32, (8, 128), 0)
    out_ref[0] = jnp.where(rid == 0, mse_part, jnp.where(rid == 1, bce_part, 0.0))


def lsh_forward(f_s, f_t, wt, bias2, *, tile_rows=None):
    """f_s, f_t: (B, D).  wt: (D, K) == weight.T (frozen projection, transposed
    once outside the per-step call path).  bias2: (1, K)."""
    B, D = f_s.shape
    K = wt.shape[1]

    # ---- Optional lane packing (free reshape + tiny block-diagonal weight) ----
    P = _pick_pack(B, D, K)
    if P > 1:
        Dp, Kp = P * D, P * K
        rows = B // P
        fs2 = f_s.reshape(rows, Dp)            # contiguous merge: no copy
        ft2 = f_t.reshape(rows, Dp)
        w_pack = jnp.kron(jnp.eye(P, dtype=wt.dtype), wt)    # (Dp, Kp) block-diag
        b_pack = jnp.tile(bias2, (1, P))                      # (1, Kp)
    else:
        Dp, Kp, rows = D, K, B
        fs2, ft2, w_pack, b_pack = f_s, f_t, wt, bias2

    isz = jnp.dtype(fs2.dtype).itemsize
    wsz = jnp.dtype(w_pack.dtype).itemsize

    # ---- Generation-aware VMEM budget (v7x: 64 MiB phys, v5e/v6e: 128 MiB) ----
    try:
        vmem_cap = int(pltpu.get_tpu_info().vmem_capacity_bytes)
    except Exception:  # conservative fallback
        vmem_cap = 64 << 20
    budget = (vmem_cap * 3) // 5              # ~38 MiB on v7x, ~77 MiB on v5e/v6e

    # Per-row VMEM cost: 2 double-buffered input streams + f32 temporaries
    # (diff/sq on Dp lanes; hs/ht/label/bce on Kp lanes).
    per_row = 4 * Dp * isz + (2 * Dp + 6 * Kp) * 4
    max_rows = max(8, budget // per_row)
    tr = max_rows if tile_rows is None else tile_rows
    tr = min(tr, max_rows, _round_up(rows, 8))
    tr = max(8, (tr // 8) * 8)

    grid = (pl.cdiv(rows, tr),)
    ragged = (rows % tr) != 0                 # NO wrapper-side pad: kernel masks tail

    kernel = functools.partial(_lsh_kernel, total_rows=rows, block_rows=tr,
                               ragged=ragged)

    need = (4 * tr * Dp * isz                 # double-buffered f_s / f_t streams
            + (Dp * Kp + Kp) * wsz            # resident W^T + bias
            + (2 * Dp + 6 * Kp) * tr * 4      # f32 elementwise / matmul temporaries
            + 4 * 8 * 128 * 4                 # per-tile partial-sum output buffers
            + (2 << 20))                      # headroom
    vmem_limit = int(min(max(need, 16 << 20), max(32 << 20, vmem_cap - (16 << 20))))

    cost = pl.CostEstimate(
        flops=4 * rows * Dp * Kp + 10 * rows * (Dp + Kp),
        transcendentals=2 * rows * Kp,
        bytes_accessed=(2 * rows * Dp * isz + (Dp * Kp + Kp) * wsz
                        + grid[0] * 8 * 128 * 4),
    )

    parts = pl.pallas_call(
        kernel,
        out_shape=jax.ShapeDtypeStruct((grid[0], 8, 128), jnp.float32),
        grid=grid,
        in_specs=[
            pl.BlockSpec((tr, Dp), lambda i: (i, 0)),   # f_s: streamed tiles
            pl.BlockSpec((tr, Dp), lambda i: (i, 0)),   # f_t: streamed tiles
            pl.BlockSpec((Dp, Kp), lambda i: (0, 0)),   # W^T: resident, one DMA
            pl.BlockSpec((1, Kp), lambda i: (0, 0)),    # bias: resident
        ],
        out_specs=pl.BlockSpec((1, 8, 128), lambda i: (i, 0, 0)),
        compiler_params=pltpu.CompilerParams(
            dimension_semantics=("parallel",),   # per-tile partials: dual-TC on v7x
            vmem_limit_bytes=vmem_limit,
        ),
        cost_estimate=cost,
    )(fs2, ft2, w_pack, b_pack)

    # Tiny wrapper-side combine of the per-tile partials.
    return (jnp.sum(parts[:, 0, 0]) / jnp.float32(B * D)
            + jnp.sum(parts[:, 1, 0]) / jnp.float32(B * K))


def lsh_reference(f_s, f_t, weight, bias):
    """Pure-JAX reference mirroring the PyTorch forward."""
    l2 = jnp.mean((f_s - f_t) ** 2)
    hs = f_s @ weight.T + bias
    ht = f_t @ weight.T + bias
    y = (ht > 0).astype(jnp.float32)
    bce = jnp.mean(jnp.maximum(hs, 0.0) - hs * y + jnp.log1p(jnp.exp(-jnp.abs(hs))))
    return l2 + bce


if __name__ == "__main__":
    input_dim = 32
    output_dim = 16
    std = 1.0

    key = jax.random.PRNGKey(0)
    k_fs, k_ft, k_w, k_b = jax.random.split(key, 4)

    # Deterministic parameter init matching _initialize(): W ~ N(0, std^2), b = 0.
    weight = std * jax.random.normal(k_w, (output_dim, input_dim), dtype=jnp.float32)
    bias = jnp.zeros((output_dim,), dtype=jnp.float32)
    wt = jnp.asarray(weight.T)            # (input_dim, output_dim), transposed once
    b2 = bias.reshape(1, -1)              # (1, output_dim)

    # Case 1: batch % 8 == 0 -> lane-packed path (P=8: 256 feature / 128 hash lanes).
    batch = 64
    f_s = jax.random.normal(k_fs, (batch, input_dim), dtype=jnp.float32)
    f_t = jax.random.normal(k_ft, (batch, input_dim), dtype=jnp.float32)
    loss = lsh_forward(f_s, f_t, wt, b2)
    jax.block_until_ready(loss)
    ref = lsh_reference(f_s, f_t, weight, bias)
    assert jnp.allclose(loss, ref, rtol=1e-5, atol=1e-5), (loss, ref)

    # Case 2: batch=12 -> P=4 packed path with a ragged (masked) tail block.
    batch2 = 12
    f_s2 = jax.random.normal(k_fs, (batch2, input_dim), dtype=jnp.float32)
    f_t2 = jax.random.normal(k_ft, (batch2, input_dim), dtype=jnp.float32)
    loss2 = lsh_forward(f_s2, f_t2, wt, b2)
    jax.block_until_ready(loss2)
    ref2 = lsh_reference(f_s2, f_t2, weight, bias)
    assert jnp.allclose(loss2, ref2, rtol=1e-5, atol=1e-5), (loss2, ref2)

    # Case 3: ragged batch + nonzero bias (as produced by init_bias) -> unpacked
    # fallback path, in-kernel row mask, exact (hash_t + b > 0) label handling.
    batch3 = 13
    bias3 = 0.3 * jax.random.normal(k_b, (output_dim,), dtype=jnp.float32)
    b3 = bias3.reshape(1, -1)
    f_s3 = jax.random.normal(k_fs, (batch3, input_dim), dtype=jnp.float32)
    f_t3 = jax.random.normal(k_ft, (batch3, input_dim), dtype=jnp.float32)
    loss3 = lsh_forward(f_s3, f_t3, wt, b3)
    jax.block_until_ready(loss3)
    ref3 = lsh_reference(f_s3, f_t3, weight, bias3)
    assert jnp.allclose(loss3, ref3, rtol=1e-5, atol=1e-5), (loss3, ref3)

    print("KERNEL_OK")
</pallas_src>

<mosaic_0001>
module attributes {stable_mosaic.version = 11 : i64} {
  func.func @_lsh_kernel(%arg0: i32, %arg1: memref<8x256xf32, #tpu.memory_space<vmem>>, %arg2: memref<8x256xf32, #tpu.memory_space<vmem>>, %arg3: memref<256x128xf32, #tpu.memory_space<vmem>>, %arg4: memref<1x128xf32, #tpu.memory_space<vmem>>, %arg5: memref<1x8x128xf32, #tpu.memory_space<vmem>>) attributes {dimension_semantics = [#tpu.dimension_semantics<parallel>], iteration_bounds = array<i64: 1>, scalar_prefetch = 0 : i64, scratch_operands = 0 : i64, tpu.core_type = #tpu.core_type<tc>, window_params = [{transform_indices = @transform_0, window_bounds = array<i64: 8, 256>}, {transform_indices = @transform_1, window_bounds = array<i64: 8, 256>}, {pipeline_mode = #tpu.pipeline_mode<synchronous>, transform_indices = @transform_2, window_bounds = array<i64: 256, 128>}, {pipeline_mode = #tpu.pipeline_mode<synchronous>, transform_indices = @transform_3, window_bounds = array<i64: 1, 128>}, {transform_indices = @transform_4, window_bounds = array<i64: 1, 8, 128>}]} {
    %c0 = arith.constant 0 : index
    %c0_0 = arith.constant 0 : index
    %0 = vector.load %arg1[%c0, %c0_0] : memref<8x256xf32, #tpu.memory_space<vmem>>, vector<8x256xf32>
    %c0_1 = arith.constant 0 : index
    %c0_2 = arith.constant 0 : index
    %1 = vector.load %arg2[%c0_1, %c0_2] : memref<8x256xf32, #tpu.memory_space<vmem>>, vector<8x256xf32>
    %c0_3 = arith.constant 0 : index
    %c0_4 = arith.constant 0 : index
    %2 = vector.load %arg3[%c0_3, %c0_4] : memref<256x128xf32, #tpu.memory_space<vmem>>, vector<256x128xf32>
    %c0_5 = arith.constant 0 : index
    %c0_6 = arith.constant 0 : index
    %3 = vector.load %arg4[%c0_5, %c0_6] : memref<1x128xf32, #tpu.memory_space<vmem>>, vector<1x128xf32>
    %4 = arith.subf %0, %1 : vector<8x256xf32>
    %5 = arith.mulf %4, %4 : vector<8x256xf32>
    %cst = arith.constant dense<0.000000e+00> : vector<8x128xf32>
    %6 = tpu.matmul %0, %2, %cst {dimension_numbers = #tpu.dot_dimension_numbers<[1], [0], [0], [1], [0, 0, 1, 1], [], []>} : vector<8x256xf32>, vector<256x128xf32>, vector<8x128xf32> -> vector<8x128xf32>
    %7 = vector.broadcast %3 : vector<1x128xf32> to vector<8x128xf32>
    %8 = arith.addf %6, %7 : vector<8x128xf32>
    %cst_7 = arith.constant dense<0.000000e+00> : vector<8x128xf32>
    %9 = tpu.matmul %1, %2, %cst_7 {dimension_numbers = #tpu.dot_dimension_numbers<[1], [0], [0], [1], [0, 0, 1, 1], [], []>} : vector<8x256xf32>, vector<256x128xf32>, vector<8x128xf32> -> vector<8x128xf32>
    %10 = vector.broadcast %3 : vector<1x128xf32> to vector<8x128xf32>
    %11 = arith.addf %9, %10 : vector<8x128xf32>
    %cst_8 = arith.constant 0.000000e+00 : f32
    %12 = vector.broadcast %cst_8 : f32 to vector<8x128xf32>
    %13 = arith.cmpf ogt, %11, %12 : vector<8x128xf32>
    %14 = arith.extui %13 : vector<8x128xi1> to vector<8x128xi32>
    %15 = arith.sitofp %14 : vector<8x128xi32> to vector<8x128xf32>
    %cst_9 = arith.constant 0.000000e+00 : f32
    %16 = vector.broadcast %cst_9 : f32 to vector<8x128xf32>
    %17 = arith.maximumf %8, %16 : vector<8x128xf32>
    %18 = arith.mulf %8, %15 : vector<8x128xf32>
    %19 = arith.subf %17, %18 : vector<8x128xf32>
    %20 = math.absf %8 : vector<8x128xf32>
    %cst_10 = arith.constant 0.000000e+00 : f32
    %21 = vector.broadcast %cst_10 : f32 to vector<8x128xf32>
    %22 = arith.subf %21, %20 : vector<8x128xf32>
    %23 = math.exp %22 : vector<8x128xf32>
    %24 = math.log1p %23 : vector<8x128xf32>
    %25 = arith.addf %19, %24 : vector<8x128xf32>
    %26 = vector.shape_cast %5 : vector<8x256xf32> to vector<1x8x256xf32>
    %cst_11 = arith.constant dense<0.000000e+00> : vector<1xf32>
    %27 = vector.multi_reduction <add>, %26, %cst_11 [1, 2] : vector<1x8x256xf32> to vector<1xf32>
    %28 = vector.shape_cast %27 : vector<1xf32> to vector<1x1x1xf32>
    %29 = vector.extract %28[0, 0, 0] : f32 from vector<1x1x1xf32>
    %30 = vector.shape_cast %25 : vector<8x128xf32> to vector<1x8x128xf32>
    %cst_12 = arith.constant dense<0.000000e+00> : vector<1xf32>
    %31 = vector.multi_reduction <add>, %30, %cst_12 [1, 2] : vector<1x8x128xf32> to vector<1xf32>
    %32 = vector.shape_cast %31 : vector<1xf32> to vector<1x1x1xf32>
    %33 = vector.extract %32[0, 0, 0] : f32 from vector<1x1x1xf32>
    %34 = tpu.iota {dimensions = array<i32: 0>} : vector<8x128xi32>
    %c0_i32 = arith.constant 0 : i32
    %35 = vector.broadcast %c0_i32 : i32 to vector<8x128xi32>
    %36 = arith.cmpi eq, %34, %35 : vector<8x128xi32>
    %c1_i32 = arith.constant 1 : i32
    %37 = vector.broadcast %c1_i32 : i32 to vector<8x128xi32>
    %38 = arith.cmpi eq, %34, %37 : vector<8x128xi32>
    %cst_13 = arith.constant 0.000000e+00 : f32
    %39 = vector.broadcast %33 : f32 to vector<8x128xf32>
    %40 = vector.broadcast %cst_13 : f32 to vector<8x128xf32>
    %41 = arith.select %38, %39, %40 : vector<8x128xi1>, vector<8x128xf32>
    %42 = vector.broadcast %29 : f32 to vector<8x128xf32>
    %43 = arith.select %36, %42, %41 : vector<8x128xi1>, vector<8x128xf32>
    %c0_14 = arith.constant 0 : index
    %c0_15 = arith.constant 0 : index
    %c0_16 = arith.constant 0 : index
    %44 = vector.load %arg5[%c0_14, %c0_15, %c0_16] : memref<1x8x128xf32, #tpu.memory_space<vmem>>, vector<1x8x128xf32>
    %45 = vector.shape_cast %44 : vector<1x8x128xf32> to vector<8x128xf32>
    %46 = vector.shape_cast %43 : vector<8x128xf32> to vector<1x8x128xf32>
    tpu.vector_store %arg5[%c0_14, %c0_15, %c0_16], %46 {strides = array<i32>} : memref<1x8x128xf32, #tpu.memory_space<vmem>>, vector<1x8x128xf32>,
    return
  }
  func.func @transform_0(%arg0: i32) -> (i32, i32) {
    %c0_i32 = arith.constant 0 : i32
    %c0_i32_0 = arith.constant 0 : i32
    return %arg0, %c0_i32 : i32, i32
  }
  func.func @transform_1(%arg0: i32) -> (i32, i32) {
    %c0_i32 = arith.constant 0 : i32
    %c0_i32_0 = arith.constant 0 : i32
    return %arg0, %c0_i32 : i32, i32
  }
  func.func @transform_2(%arg0: i32) -> (i32, i32) {
    %c0_i32 = arith.constant 0 : i32
    %c0_i32_0 = arith.constant 0 : i32
    %c0_i32_1 = arith.constant 0 : i32
    return %c0_i32, %c0_i32_0 : i32, i32
  }
  func.func @transform_3(%arg0: i32) -> (i32, i32) {
    %c0_i32 = arith.constant 0 : i32
    %c0_i32_0 = arith.constant 0 : i32
    %c0_i32_1 = arith.constant 0 : i32
    return %c0_i32, %c0_i32_0 : i32, i32
  }
  func.func @transform_4(%arg0: i32) -> (i32, i32, i32) {
    %c0_i32 = arith.constant 0 : i32
    %c0_i32_0 = arith.constant 0 : i32
    %c0_i32_1 = arith.constant 0 : i32
    return %arg0, %c0_i32, %c0_i32_0 : i32, i32, i32
  }
}

</mosaic_0001>

<llo_original>
// kernel: tpu_custom_call.1
$region0: #{tpu_custom_call.1}
  #allocation0 [shape = 'u32[]', space=smem, size = 0x4, offset = 0x4, fixed_abs, tag = 'smem constant byte address 0x4 - core index']
  #allocation1 [shape = 'u32[144,128]{1,0:T(1,128)}', space=vmem, size = 0x12000, scoped, tag = 'internal scratch']
  %s0 = inlined_call_operand.hbm [shape: f32[8,256], index: 0, kind: input, shape index: {}]
  %s1 = inlined_call_operand.hbm [shape: f32[8,256], index: 1, kind: input, shape index: {}]
  %s2 = inlined_call_operand.hbm [shape: f32[256,128], index: 2, kind: input, shape index: {}]
  %s3 = inlined_call_operand.vmem [shape: f32[1,128], index: 3, kind: input, shape index: {}]
  %s4 = inlined_call_operand.hbm [shape: f32[1,8,128], index: 4, kind: output, shape index: {}]
  %s5 = sld [smem:[#allocation0]]
  $region38: #{tpu_custom_call.1} parent=0
    _
  %s7 = ssub.s32 1, %s5
  %s8 = scalar_select 0, %s7, %s5
  $region1: #{tpu_custom_call.1} parent=0
    #allocation2 [shape = 'u8[8192]{0}', space=vmem, size = 0x2000, scoped, tag = 'input window, operand 0, single buffered']
    #allocation3 [shape = 's32[1]{0}', space=sflag, size = 0x4, scoped, tag = 'scoped memory for tpu_custom_call.1']
    #allocation4 [shape = 's32[1]{0}', space=sflag, size = 0x4, scoped, tag = 'scoped memory for tpu_custom_call.1']
    #allocation5 [shape = 'u8[8192]{0}', space=vmem, size = 0x2000, scoped, tag = 'input window, operand 1, single buffered']
    #allocation6 [shape = 's32[1]{0}', space=sflag, size = 0x4, scoped, tag = 'scoped memory for tpu_custom_call.1']
    #allocation7 [shape = 'u8[131072]{0}', space=vmem, size = 0x20000, scoped, tag = 'input window, operand 2, single buffered']
    #allocation8 [shape = 'u8[4096]{0}', space=vmem, size = 0x1000, scoped, tag = 'output window, operand 0, single buffered']
    %9 = vsyncpa [#allocation3], 0
    %10 = vsyncpa [#allocation6], 0
    %11 = vsyncpa [#allocation4], 0
    // Predicated region
    $region2: #{tpu_custom_call.1} parent=1 // pred_check
      _
    $region3: #{tpu_custom_call.1} parent=1 // pred_check_branch
      %13 = sbr.rel (0) target = $region5
    $region4: #{tpu_custom_call.1} parent=1 // pred_region
      %s15 = ssub.s32 256, 256
      %16 = vsyncadd [#allocation3], %s15
      %s18 = sshll.u32 [#allocation2], 4
      %s19 = int_to_ptr.vmem [resolvable:$true] %s18
      %21 = dma.hbm_to_vmem [thread:$0]  %s0, 256, %s19, [#allocation3]
    $region5: #{tpu_custom_call.1} parent=1 // pred_fallthru
      _
    // Predicated region
    $region6: #{tpu_custom_call.1} parent=1 // pred_check
      _
    $region7: #{tpu_custom_call.1} parent=1 // pred_check_branch
      %23 = sbr.rel (0) target = $region9
    $region8: #{tpu_custom_call.1} parent=1 // pred_region
      %s25 = ssub.s32 256, 256
      %26 = vsyncadd [#allocation6], %s25
      %s28 = sshll.u32 [#allocation5], 4
      %s29 = int_to_ptr.vmem [resolvable:$true] %s28
      %31 = dma.hbm_to_vmem [thread:$0]  %s1, 256, %s29, [#allocation6]
    $region9: #{tpu_custom_call.1} parent=1 // pred_fallthru
      _
    // Predicated region
    $region10: #{tpu_custom_call.1} parent=1 // pred_check
      _
    $region11: #{tpu_custom_call.1} parent=1 // pred_check_branch
      %33 = sbr.rel (0) target = $region13
    $region12: #{tpu_custom_call.1} parent=1 // pred_region
      %s35 = ssub.s32 4096, 4096
      %36 = vsyncadd [#allocation6], %s35
      %s37 = sshll.u32 [#allocation7], 4
      %s38 = int_to_ptr.vmem [resolvable:$true] %s37
      %43 = dma.hbm_to_vmem [thread:$0]  %s2, 4096, %s38, [#allocation6], 128, 128, 8
    $region13: #{tpu_custom_call.1} parent=1 // pred_fallthru
      _
    // Predicated region
    $region14: #{tpu_custom_call.1} parent=1 // pred_check
      _
    $region15: #{tpu_custom_call.1} parent=1 // pred_check_branch
      %45 = sbr.rel (0) target = $region17
    $region16: #{tpu_custom_call.1} parent=1 // pred_region
      _
    $region17: #{tpu_custom_call.1} parent=1 // pred_fallthru
      _
    // Predicated region
    $region18: #{tpu_custom_call.1} parent=1 // pred_check
      _
    $region19: #{tpu_custom_call.1} parent=1 // pred_check_branch
      %47 = sbr.rel (0) target = $region21
    $region20: #{tpu_custom_call.1} parent=1 // pred_region
      %48 = dma.done [#allocation3], 256
    $region21: #{tpu_custom_call.1} parent=1 // pred_fallthru
      _
    // Predicated region
    $region22: #{tpu_custom_call.1} parent=1 // pred_check
      _
    $region23: #{tpu_custom_call.1} parent=1 // pred_check_branch
      %50 = sbr.rel (0) target = $region25
    $region24: #{tpu_custom_call.1} parent=1 // pred_region
      %51 = dma.done [#allocation6], 256
    $region25: #{tpu_custom_call.1} parent=1 // pred_fallthru
      _
    // Predicated region
    $region26: #{tpu_custom_call.1} parent=1 // pred_check
      _
    $region27: #{tpu_custom_call.1} parent=1 // pred_check_branch
      %53 = sbr.rel (0) target = $region29
    $region28: #{tpu_custom_call.1} parent=1 // pred_region
      %54 = dma.done [#allocation6], 4096
    $region29: #{tpu_custom_call.1} parent=1 // pred_fallthru
      _
    %v55 = vld [vmem:[#allocation2] sm:$0xff]
    %v56 = vld [vmem:[#allocation2 + $0x8] sm:$0xff]
    %v57 = vld [vmem:[#allocation5] sm:$0xff]
    %v58 = vld [vmem:[#allocation5 + $0x8] sm:$0xff]
    %v59 = vld [vmem:[#allocation7] sm:$0xff]
    %v60 = vld [vmem:[#allocation7 + $0x8] sm:$0xff]
    %v61 = vld [vmem:[#allocation7 + $0x10] sm:$0xff]
    %v62 = vld [vmem:[#allocation7 + $0x18] sm:$0xff]
    %v63 = vld [vmem:[#allocation7 + $0x20] sm:$0xff]
    %v64 = vld [vmem:[#allocation7 + $0x28] sm:$0xff]
    %v65 = vld [vmem:[#allocation7 + $0x30] sm:$0xff]
    %v66 = vld [vmem:[#allocation7 + $0x38] sm:$0xff]
    %v67 = vld [vmem:[#allocation7 + $0x40] sm:$0xff]
    %v68 = vld [vmem:[#allocation7 + $0x48] sm:$0xff]
    %v69 = vld [vmem:[#allocation7 + $0x50] sm:$0xff]
    %v70 = vld [vmem:[#allocation7 + $0x58] sm:$0xff]
    %v71 = vld [vmem:[#allocation7 + $0x60] sm:$0xff]
    %v72 = vld [vmem:[#allocation7 + $0x68] sm:$0xff]
    %v73 = vld [vmem:[#allocation7 + $0x70] sm:$0xff]
    %v74 = vld [vmem:[#allocation7 + $0x78] sm:$0xff]
    %v75 = vld [vmem:[#allocation7 + $0x80] sm:$0xff]
    %v76 = vld [vmem:[#allocation7 + $0x88] sm:$0xff]
    %v77 = vld [vmem:[#allocation7 + $0x90] sm:$0xff]
    %v78 = vld [vmem:[#allocation7 + $0x98] sm:$0xff]
    %v79 = vld [vmem:[#allocation7 + $0xa0] sm:$0xff]
    %v80 = vld [vmem:[#allocation7 + $0xa8] sm:$0xff]
    %v81 = vld [vmem:[#allocation7 + $0xb0] sm:$0xff]
    %v82 = vld [vmem:[#allocation7 + $0xb8] sm:$0xff]
    %v83 = vld [vmem:[#allocation7 + $0xc0] sm:$0xff]
    %v84 = vld [vmem:[#allocation7 + $0xc8] sm:$0xff]
    %v85 = vld [vmem:[#allocation7 + $0xd0] sm:$0xff]
    %v86 = vld [vmem:[#allocation7 + $0xd8] sm:$0xff]
    %v87 = vld [vmem:[#allocation7 + $0xe0] sm:$0xff]
    %v88 = vld [vmem:[#allocation7 + $0xe8] sm:$0xff]
    %v89 = vld [vmem:[#allocation7 + $0xf0] sm:$0xff]
    %v90 = vld [vmem:[#allocation7 + $0xf8] sm:$0xff]
    %v91 = vld [vmem:[%s3] sm:$0x1]
    %v92 = vsub.f32 %v55, %v57
    %v93 = vsub.f32 %v56, %v58
    %v94 = vmul.f32 %v92, %v92
    %v95 = vmul.f32 %v93, %v93
    %v97 = vlaneseq
    %v98 = vshrl.u32 %v97, 7
    %v99 = vsub.s32 0, %v98
    %v100 = vrot.slane %v91, %v99
    %102 = vmatprep.subr.mxu0 0.0
    %103 = vmatpush1.msra.mxu0 %v59
    %104 = vmatprep.subr.mxu0 0.0
    %105 = vmatpush1.msra.mxu0 %v60
    %106 = vmatprep.subr.mxu0 0.0
    %107 = vmatpush1.msra.mxu0 %v61
    %108 = vmatprep.subr.mxu0 0.0
    %109 = vmatpush1.msra.mxu0 %v62
    %110 = vmatprep.subr.mxu0 0.0
    %111 = vmatpush1.msra.mxu0 %v63
    %112 = vmatprep.subr.mxu0 0.0
    %113 = vmatpush1.msra.mxu0 %v64
    %114 = vmatprep.subr.mxu0 0.0
    %115 = vmatpush1.msra.mxu0 %v65
    %116 = vmatprep.subr.mxu0 0.0
    %117 = vmatpush1.msra.mxu0 %v66
    %118 = vmatprep.subr.mxu0 0.0
    %119 = vmatpush1.msra.mxu0 %v67
    %120 = vmatprep.subr.mxu0 0.0
    %121 = vmatpush1.msra.mxu0 %v68
    %122 = vmatprep.subr.mxu0 0.0
    %123 = vmatpush1.msra.mxu0 %v69
    %124 = vmatprep.subr.mxu0 0.0
    %125 = vmatpush1.msra.mxu0 %v70
    %126 = vmatprep.subr.mxu0 0.0
    %127 = vmatpush1.msra.mxu0 %v71
    %128 = vmatprep.subr.mxu0 0.0
    %129 = vmatpush1.msra.mxu0 %v72
    %130 = vmatprep.subr.mxu0 0.0
    %131 = vmatpush1.msra.mxu0 %v73
    %132 = vmatprep.subr.mxu0 0.0
    %133 = vmatpush1.msra.mxu0 %v74
    %134 = vmatprep.subr.mxu0 0.0
    %135 = vmatpush1.msra.mxu0 %v75
    %136 = vmatprep.subr.mxu0 0.0
    %137 = vmatpush1.msra.mxu0 %v76
    %138 = vmatprep.subr.mxu0 0.0
    %139 = vmatpush1.msra.mxu0 %v77
    %140 = vmatprep.subr.mxu0 0.0
    %141 = vmatpush1.msra.mxu0 %v78
    %142 = vmatprep.subr.mxu0 0.0
    %143 = vmatpush1.msra.mxu0 %v79
    %144 = vmatprep.subr.mxu0 0.0
    %145 = vmatpush1.msra.mxu0 %v80
    %146 = vmatprep.subr.mxu0 0.0
    %147 = vmatpush1.msra.mxu0 %v81
    %148 = vmatprep.subr.mxu0 0.0
    %149 = vmatpush1.msra.mxu0 %v82
    %150 = vmatprep.subr.mxu0 0.0
    %151 = vmatpush1.msra.mxu0 %v83
    %152 = vmatprep.subr.mxu0 0.0
    %153 = vmatpush1.msra.mxu0 %v84
    %154 = vmatprep.subr.mxu0 0.0
    %155 = vmatpush1.msra.mxu0 %v85
    %156 = vmatprep.subr.mxu0 0.0
    %157 = vmatpush1.msra.mxu0 %v86
    %158 = vmatprep.subr.mxu0 0.0
    %159 = vmatpush1.msra.mxu0 %v87
    %160 = vmatprep.subr.mxu0 0.0
    %161 = vmatpush1.msra.mxu0 %v88
    %162 = vmatprep.subr.mxu0 0.0
    %163 = vmatpush1.msra.mxu0 %v89
    %164 = vmatprep.subr.mxu0 0.0
    %165 = vmatpush1.msra.mxu0 %v90
    %166 = vmatprep.mubr.f32.mxu0 %v56
    %167 = vmatmul.mubr.f32.gmra.mrb[0].mxu0 %v55
    %v168 = vpop.f32.mrb[0].mxu0
    %v169 = vadd.f32 %v100, %v168
    %v170 = vpop.f32.mrb[0].mxu0
    %171 = vdwg.mxu0
    %172 = vmatprep.subr.mxu0 0.0
    %173 = vmatpush1.msra.mxu0 %v59
    %174 = vmatprep.subr.mxu0 0.0
    %175 = vmatpush1.msra.mxu0 %v60
    %176 = vmatprep.subr.mxu0 0.0
    %177 = vmatpush1.msra.mxu0 %v61
    %178 = vmatprep.subr.mxu0 0.0
    %179 = vmatpush1.msra.mxu0 %v62
    %180 = vmatprep.subr.mxu0 0.0
    %181 = vmatpush1.msra.mxu0 %v63
    %182 = vmatprep.subr.mxu0 0.0
    %183 = vmatpush1.msra.mxu0 %v64
    %184 = vmatprep.subr.mxu0 0.0
    %185 = vmatpush1.msra.mxu0 %v65
    %186 = vmatprep.subr.mxu0 0.0
    %187 = vmatpush1.msra.mxu0 %v66
    %188 = vmatprep.subr.mxu0 0.0
    %189 = vmatpush1.msra.mxu0 %v67
    %190 = vmatprep.subr.mxu0 0.0
    %191 = vmatpush1.msra.mxu0 %v68
    %192 = vmatprep.subr.mxu0 0.0
    %193 = vmatpush1.msra.mxu0 %v69
    %194 = vmatprep.subr.mxu0 0.0
    %195 = vmatpush1.msra.mxu0 %v70
    %196 = vmatprep.subr.mxu0 0.0
    %197 = vmatpush1.msra.mxu0 %v71
    %198 = vmatprep.subr.mxu0 0.0
    %199 = vmatpush1.msra.mxu0 %v72
    %200 = vmatprep.subr.mxu0 0.0
    %201 = vmatpush1.msra.mxu0 %v73
    %202 = vmatprep.subr.mxu0 0.0
    %203 = vmatpush1.msra.mxu0 %v74
    %204 = vmatprep.subr.mxu0 0.0
    %205 = vmatpush1.msra.mxu0 %v75
    %206 = vmatprep.subr.mxu0 0.0
    %207 = vmatpush1.msra.mxu0 %v76
    %208 = vmatprep.subr.mxu0 0.0
    %209 = vmatpush1.msra.mxu0 %v77
    %210 = vmatprep.subr.mxu0 0.0
    %211 = vmatpush1.msra.mxu0 %v78
    %212 = vmatprep.subr.mxu0 0.0
    %213 = vmatpush1.msra.mxu0 %v79
    %214 = vmatprep.subr.mxu0 0.0
    %215 = vmatpush1.msra.mxu0 %v80
    %216 = vmatprep.subr.mxu0 0.0
    %217 = vmatpush1.msra.mxu0 %v81
    %218 = vmatprep.subr.mxu0 0.0
    %219 = vmatpush1.msra.mxu0 %v82
    %220 = vmatprep.subr.mxu0 0.0
    %221 = vmatpush1.msra.mxu0 %v83
    %222 = vmatprep.subr.mxu0 0.0
    %223 = vmatpush1.msra.mxu0 %v84
    %224 = vmatprep.subr.mxu0 0.0
    %225 = vmatpush1.msra.mxu0 %v85
    %226 = vmatprep.subr.mxu0 0.0
    %227 = vmatpush1.msra.mxu0 %v86
    %228 = vmatprep.subr.mxu0 0.0
    %229 = vmatpush1.msra.mxu0 %v87
    %230 = vmatprep.subr.mxu0 0.0
    %231 = vmatpush1.msra.mxu0 %v88
    %232 = vmatprep.subr.mxu0 0.0
    %233 = vmatpush1.msra.mxu0 %v89
    %234 = vmatprep.subr.mxu0 0.0
    %235 = vmatpush1.msra.mxu0 %v90
    %236 = vmatprep.mubr.f32.mxu0 %v58
    %237 = vmatmul.mubr.f32.gmra.mrb[0].mxu0 %v57
    %v238 = vpop.f32.mrb[0].mxu0
    %v239 = vadd.f32 %v100, %v238
    %v240 = vpop.f32.mrb[0].mxu0
    %241 = vdwg.mxu0
    %vm242 = vcmp.gt.f32.partialorder %v239, 0.0
    %v243 = vsel %vm242, 1, 0
    %v244 = vcvt.s32.f32 %v243
    %v245 = vmax.f32 %v169, 0.0
    %v246 = vmul.f32 %v169, %v244
    %v247 = vsub.f32 %v245, %v246
    %v248 = vand.u32 2147483647, %v169
    %v249 = vsub.f32 0.0, %v248
    %v250 = vmul.f32 %v249, 1.442695
    %v251 = vpow.pop %v250
    %v252 = vadd.f32 %v251, 1.0
    %v253 = vlog2.pop %v252
    %v254 = vmul.f32 %v253, 0.6931472
    %v255 = vmul.f32 -0.5, %v251
    %v256 = vadd.f32 %v255, 1.0
    %v257 = vmul.f32 %v256, %v251
    %v258 = vand.u32 2147483647, %v251
    %vm259 = vcmp.lt.f32.partialorder %v258, 0.0004427343
    %v260 = vsel %vm259, %v257, %v254
    %v261 = vadd.f32 %v247, %v260
    %v262 = vadd.f32 %v94, %v95
    %263 = vadd.xlane.f32.xlu0 %v262
    %v264 = vpop.xlane.xlu0 %263
    %v265 = vrot.slane %v264, 4
    %v266 = vadd.f32 %v264, %v265
    %v267 = vrot.slane %v266, 2
    %v268 = vadd.f32 %v266, %v267
    %v269 = vrot.slane %v268, 1
    %v270 = vadd.f32 %v268, %v269
    %s271 = vtos %v270
    %272 = vadd.xlane.f32.xlu0 %v261
    %v273 = vpop.xlane.xlu0 %272
    %v274 = vrot.slane %v273, 4
    %v275 = vadd.f32 %v273, %v274
    %v276 = vrot.slane %v275, 2
    %v277 = vadd.f32 %v275, %v276
    %v278 = vrot.slane %v277, 1
    %v279 = vadd.f32 %v277, %v278
    %s280 = vtos %v279
    %v281 = vlaneseq
    %v282 = vshrl.u32 %v281, 7
    %vm283 = vcmp.eq.s32.totalorder %v282, 0
    %vm284 = vcmp.eq.s32.totalorder %v282, 1
    %v285 = vstv %s280
    %v286 = vsel %vm284, %v285, 0.0
    %v287 = vstv %s271
    %v288 = vsel %vm283, %v287, %v286
    %289 = vst [vmem:[#allocation8] sm:$0xff] %v288
    // Predicated region
    $region30: #{tpu_custom_call.1} parent=1 // pred_check
      _
    $region31: #{tpu_custom_call.1} parent=1 // pred_check_branch
      %291 = sbr.rel (0) target = $region33
    $region32: #{tpu_custom_call.1} parent=1 // pred_region
      %s293 = ssub.s32 128, 128
      %294 = vsyncadd [#allocation4], %s293
      %s296 = sshll.u32 [#allocation8], 4
      %s297 = int_to_ptr.vmem [resolvable:$true] %s296
      %299 = dma.vmem_to_hbm [thread:$0]  %s297, 128, %s4, [#allocation4]
    $region33: #{tpu_custom_call.1} parent=1 // pred_fallthru
      _
    // Predicated region
    $region34: #{tpu_custom_call.1} parent=1 // pred_check
      _
    $region35: #{tpu_custom_call.1} parent=1 // pred_check_branch
      %301 = sbr.rel (0) target = $region37
    $region36: #{tpu_custom_call.1} parent=1 // pred_region
      %302 = dma.done [#allocation4], 128
    $region37: #{tpu_custom_call.1} parent=1 // pred_fallthru
      _
    %303 = vsyncpa [#allocation3], 1
    %304 = vsyncpa [#allocation6], 1
    %305 = vsyncpa [#allocation4], 1

</llo_original>
